<compile_context>
chip_gen: v5e
topology: v5e:2x2
jax: 0.10.0
libtpu: 0.0.40
codegen_flags: <defaults>
</compile_context>

<pallas_src>
import functools

import jax
import jax.numpy as jnp
from jax import lax
from jax.experimental import pallas as pl
from jax.experimental.pallas import tpu as pltpu


def _self_attn_c_kernel(x_ref, wqk_ref, bqk_ref, wv_ref, bv_ref, wo_ref,
                        bo_ref, gamma_ref, out_ref, *, cl, n_valid,
                        compute_dtype):
    f32 = jnp.float32
    gamma = gamma_ref[0]                                     # SMEM scalar

    # Weights are tiny; load once per grid step.
    wqk = wqk_ref[...].astype(compute_dtype)                 # (2*Cl, C)
    bqk = bqk_ref[...]                                       # (2*Cl, 1) f32
    wv = wv_ref[...]                                         # (Cl, C)   f32
    bv = bv_ref[...]                                         # (Cl, 1)   f32
    wo = wo_ref[...]                                         # (C, Cl)   f32
    bo = bo_ref[...]                                         # (C, 1)    f32

    bt = x_ref.shape[0]                                      # static batch tile
    n_pad = x_ref.shape[-1]                                  # static padded N

    for bi in range(bt):                                     # static unroll
        xb = x_ref[bi]                                       # (C, Np) f32
        xc = xb.astype(compute_dtype)

        # Fused Q/K projection: one (2*Cl, C) @ (C, Np) MXU pass.
        qk = jnp.dot(wqk, xc, preferred_element_type=f32) + bqk      # (2*Cl, Np)
        if n_pad != n_valid:
            # Padded columns of x are zero, but the +bias made qk nonzero there;
            # zero them so they don't contribute to `energy`.
            col = lax.broadcasted_iota(jnp.int32, qk.shape, 1)
            qk = jnp.where(col < n_valid, qk, 0.0)

        # energy = K @ Q^T, taken as the off-diagonal block of the Gram matrix
        # of the stacked [Q; K]: one 8-row MXU pass instead of two 4-row ones.
        qk_c = qk.astype(compute_dtype)
        gram = lax.dot_general(qk_c, qk_c, (((1,), (1,)), ((), ())),
                               preferred_element_type=f32)            # (2Cl, 2Cl)
        energy = gram[cl:, :cl]                                       # (Cl, Cl)
        energy = energy - jnp.max(energy, axis=-1, keepdims=True)
        p = jnp.exp(energy)
        attn = p / jnp.sum(p, axis=-1, keepdims=True)                 # softmax(dim=-1)

        # Algebraic fusion of the value/output path (Cl << C):
        #   attention_out = attn^T @ (Wv x + bv)
        #   o = Wo attention_out + bo = (Wo attn^T Wv) x + (Wo attn^T bv + bo)
        aw = lax.dot_general(attn, wv, (((0,), (0,)), ((), ())),
                             preferred_element_type=f32)              # (Cl, C) = attn^T Wv
        w_eff = jnp.dot(wo, aw, preferred_element_type=f32)           # (C, C)
        ab = lax.dot_general(attn, bv, (((0,), (0,)), ((), ())),
                             preferred_element_type=f32)              # (Cl, 1) = attn^T bv
        b_eff = jnp.dot(wo, ab, preferred_element_type=f32) + bo      # (C, 1)

        o = jnp.dot(w_eff.astype(compute_dtype), xc,
                    preferred_element_type=f32) + b_eff               # (C, Np) f32

        out_ref[bi] = (gamma * o + xb).astype(out_ref.dtype)          # residual in f32


def _choose_batch_tile(B, bytes_per_batch, target_bytes=1 << 20):
    """Pick a batch tile so each grid step moves ~target_bytes, while keeping
    at least 2 grid steps when B > 1 (v7x has 2 TensorCores)."""
    bt = int(max(1, min(B, target_bytes // max(1, bytes_per_batch))))
    while B % bt:
        bt -= 1
    if bt == B and B > 1:
        bt = max(1, B // 2)
        while B % bt:
            bt -= 1
    return bt


def self_attn_c(x, params, *, compute_dtype=jnp.bfloat16):
    """Forward pass of Self_Attn_C.

    x: (B, C, H, W) float32 (NCHW, as in PyTorch).
    params: (wq, bq, wk, bk, wv, bv, wo, bo, gamma); 1x1-conv weights squeezed
            to (Cout, Cin), gamma shape (1,).
    compute_dtype: operand dtype for the MXU matmuls (accumulation stays f32,
                   and the residual gamma*o + x stays f32).
    """
    wq, bq, wk, bk, wv, bv, wo, bo, gamma = params
    B, C, H, W = x.shape
    N = H * W
    Cl = wq.shape[0]

    # Lane-dense stores: pad the spatial axis to a multiple of 128.
    Np = ((N + 127) // 128) * 128
    xf = x.reshape(B, C, N)
    if Np != N:
        xf = jnp.pad(xf, ((0, 0), (0, 0), (0, Np - N)))

    # Host-side packing of the fused Q/K projection.
    wqk = jnp.concatenate([wq, wk], axis=0)                  # (2*Cl, C)
    bqk = jnp.concatenate([bq, bk], axis=0).reshape(2 * Cl, 1)
    bv2 = bv.reshape(Cl, 1)
    bo2 = bo.reshape(C, 1)
    gamma1 = gamma.reshape(1)

    bytes_per_batch = C * Np * x.dtype.itemsize
    Bt = _choose_batch_tile(B, bytes_per_batch)
    grid = (B // Bt,)

    # Headroom for double-buffered in/out blocks plus in-kernel intermediates.
    block_bytes = Bt * bytes_per_batch
    vmem_limit = int(max(32 * 1024 * 1024, min(64 * 1024 * 1024, 6 * block_bytes)))
    # TODO(synk): for very large C*H*W (single-batch slab of several MiB) switch
    # to a two-phase N-tiled kernel (accumulate K.Q^T over N tiles, then apply
    # softmax/W_eff per N tile) instead of raising the VMEM limit further.

    kernel = functools.partial(_self_attn_c_kernel, cl=Cl, n_valid=N,
                               compute_dtype=compute_dtype)

    out = pl.pallas_call(
        kernel,
        out_shape=jax.ShapeDtypeStruct((B, C, Np), x.dtype),
        grid_spec=pltpu.PrefetchScalarGridSpec(
            num_scalar_prefetch=0,
            grid=grid,
            in_specs=[
                pl.BlockSpec((Bt, C, Np), lambda g: (g, 0, 0)),       # x slab
                pl.BlockSpec((2 * Cl, C), lambda g: (0, 0)),          # Wqk (stacked)
                pl.BlockSpec((2 * Cl, 1), lambda g: (0, 0)),          # bqk
                pl.BlockSpec((Cl, C), lambda g: (0, 0)),              # Wv
                pl.BlockSpec((Cl, 1), lambda g: (0, 0)),              # bv
                pl.BlockSpec((C, Cl), lambda g: (0, 0)),              # Wo
                pl.BlockSpec((C, 1), lambda g: (0, 0)),               # bo
                pl.BlockSpec(memory_space=pltpu.MemorySpace.SMEM),    # gamma scalar
            ],
            out_specs=pl.BlockSpec((Bt, C, Np), lambda g: (g, 0, 0)),
        ),
        compiler_params=pltpu.CompilerParams(
            dimension_semantics=("parallel",),
            vmem_limit_bytes=vmem_limit,
        ),
    )(xf, wqk, bqk, wv, bv2, wo, bo2, gamma1)

    if Np != N:
        out = out[:, :, :N]
    return out.reshape(B, C, H, W)


def ref_self_attn_c(x, params):
    """Pure-JAX f32 reference of the PyTorch forward (for correctness check)."""
    wq, bq, wk, bk, wv, bv, wo, bo, gamma = params
    B, C, H, W = x.shape
    N = H * W
    xf = x.reshape(B, C, N)
    q = jnp.einsum('lc,bcn->bln', wq, xf) + bq[None, :, None]   # (B, Cl, N)
    k = jnp.einsum('lc,bcn->bln', wk, xf) + bk[None, :, None]
    v = jnp.einsum('lc,bcn->bln', wv, xf) + bv[None, :, None]
    energy = jnp.einsum('bin,bjn->bij', k, q)                   # (B, Cl, Cl)
    attn = jax.nn.softmax(energy, axis=-1)
    attn_out = jnp.einsum('bji,bjn->bin', attn, v)              # (B, Cl, N)
    o = jnp.einsum('cl,bln->bcn', wo, attn_out) + bo[None, :, None]
    out = gamma[0] * o + xf
    return out.reshape(B, C, H, W)


if __name__ == "__main__":
    # Module config: in_dim must be divisible by latent_dim=8.
    B, C, H, W = 4, 32, 16, 16
    latent_dim = 8
    Cl = C // latent_dim

    key = jax.random.PRNGKey(0)
    ks = jax.random.split(key, 10)
    x = jax.random.normal(ks[0], (B, C, H, W), jnp.float32)

    # Deterministic synthetic parameters (Conv2d 1x1 weights/biases, gamma).
    wq = jax.random.normal(ks[1], (Cl, C), jnp.float32) * 0.1
    bq = jax.random.normal(ks[2], (Cl,), jnp.float32) * 0.1
    wk = jax.random.normal(ks[3], (Cl, C), jnp.float32) * 0.1
    bk = jax.random.normal(ks[4], (Cl,), jnp.float32) * 0.1
    wv = jax.random.normal(ks[5], (Cl, C), jnp.float32) * 0.1
    bv = jax.random.normal(ks[6], (Cl,), jnp.float32) * 0.1
    wo = jax.random.normal(ks[7], (C, Cl), jnp.float32) * 0.1
    bo = jax.random.normal(ks[8], (C,), jnp.float32) * 0.1
    # Module initializes gamma to 0 (identity output); use a nonzero value so
    # the attention path is actually exercised.
    gamma = jnp.array([0.5], jnp.float32)

    params = (wq, bq, wk, bk, wv, bv, wo, bo, gamma)
    ref = ref_self_attn_c(x, params)

    # Exact-structure check: f32 MXU operands, tight tolerance.
    out_f32 = jax.block_until_ready(self_attn_c(x, params, compute_dtype=jnp.float32))
    assert out_f32.shape == (B, C, H, W), out_f32.shape
    err_f32 = float(jnp.max(jnp.abs(out_f32 - ref)))
    assert jnp.allclose(out_f32, ref, atol=5e-4, rtol=5e-4), err_f32

    # Fast path (default): bf16 MXU operands, f32 accumulation + f32 residual.
    out_bf16 = jax.block_until_ready(self_attn_c(x, params))
    assert out_bf16.shape == (B, C, H, W), out_bf16.shape
    err_bf16 = float(jnp.max(jnp.abs(out_bf16 - ref)))
    assert jnp.allclose(out_bf16, ref, atol=5e-2, rtol=5e-2), err_bf16

    print("KERNEL_OK")
</pallas_src>

<mosaic_0001>
module attributes {stable_mosaic.version = 11 : i64} {
  func.func @_self_attn_c_kernel(%arg0: i32, %arg1: memref<2x32x256xf32, #tpu.memory_space<vmem>>, %arg2: memref<8x32xf32, #tpu.memory_space<vmem>>, %arg3: memref<8x1xf32, #tpu.memory_space<vmem>>, %arg4: memref<4x32xf32, #tpu.memory_space<vmem>>, %arg5: memref<4x1xf32, #tpu.memory_space<vmem>>, %arg6: memref<32x4xf32, #tpu.memory_space<vmem>>, %arg7: memref<32x1xf32, #tpu.memory_space<vmem>>, %arg8: memref<1xf32, #tpu.memory_space<smem>>, %arg9: memref<2x32x256xf32, #tpu.memory_space<vmem>>) attributes {dimension_semantics = [#tpu.dimension_semantics<parallel>], iteration_bounds = array<i64: 2>, scalar_prefetch = 0 : i64, scratch_operands = 0 : i64, tpu.core_type = #tpu.core_type<tc>, window_params = [{transform_indices = @transform_0, window_bounds = array<i64: 2, 32, 256>}, {pipeline_mode = #tpu.pipeline_mode<synchronous>, transform_indices = @transform_1, window_bounds = array<i64: 8, 32>}, {pipeline_mode = #tpu.pipeline_mode<synchronous>, transform_indices = @transform_2, window_bounds = array<i64: 8, 1>}, {pipeline_mode = #tpu.pipeline_mode<synchronous>, transform_indices = @transform_3, window_bounds = array<i64: 4, 32>}, {pipeline_mode = #tpu.pipeline_mode<synchronous>, transform_indices = @transform_4, window_bounds = array<i64: 4, 1>}, {pipeline_mode = #tpu.pipeline_mode<synchronous>, transform_indices = @transform_5, window_bounds = array<i64: 32, 4>}, {pipeline_mode = #tpu.pipeline_mode<synchronous>, transform_indices = @transform_6, window_bounds = array<i64: 32, 1>}, {transform_indices = @transform_7, window_bounds = array<i64: 1>}, {transform_indices = @transform_8, window_bounds = array<i64: 2, 32, 256>}]} {
    %c0 = arith.constant 0 : index
    %0 = memref.load %arg8[%c0] : memref<1xf32, #tpu.memory_space<smem>>
    %c0_0 = arith.constant 0 : index
    %c0_1 = arith.constant 0 : index
    %1 = vector.load %arg2[%c0_0, %c0_1] : memref<8x32xf32, #tpu.memory_space<vmem>>, vector<8x32xf32>
    %c0_2 = arith.constant 0 : index
    %c0_3 = arith.constant 0 : index
    %2 = vector.load %arg3[%c0_2, %c0_3] : memref<8x1xf32, #tpu.memory_space<vmem>>, vector<8x1xf32>
    %c0_4 = arith.constant 0 : index
    %c0_5 = arith.constant 0 : index
    %3 = vector.load %arg4[%c0_4, %c0_5] : memref<4x32xf32, #tpu.memory_space<vmem>>, vector<4x32xf32>
    %c0_6 = arith.constant 0 : index
    %c0_7 = arith.constant 0 : index
    %4 = vector.load %arg5[%c0_6, %c0_7] : memref<4x1xf32, #tpu.memory_space<vmem>>, vector<4x1xf32>
    %c0_8 = arith.constant 0 : index
    %c0_9 = arith.constant 0 : index
    %5 = vector.load %arg6[%c0_8, %c0_9] : memref<32x4xf32, #tpu.memory_space<vmem>>, vector<32x4xf32>
    %c0_10 = arith.constant 0 : index
    %c0_11 = arith.constant 0 : index
    %6 = vector.load %arg7[%c0_10, %c0_11] : memref<32x1xf32, #tpu.memory_space<vmem>>, vector<32x1xf32>
    %c0_12 = arith.constant 0 : index
    %c0_13 = arith.constant 0 : index
    %c0_14 = arith.constant 0 : index
    %7 = vector.load %arg1[%c0_12, %c0_13, %c0_14] : memref<2x32x256xf32, #tpu.memory_space<vmem>>, vector<1x32x256xf32>
    %8 = vector.shape_cast %7 : vector<1x32x256xf32> to vector<32x256xf32>
    %cst = arith.constant dense<0.000000e+00> : vector<8x256xf32>
    %9 = tpu.matmul %1, %8, %cst {dimension_numbers = #tpu.dot_dimension_numbers<[1], [0], [0], [1], [0, 0, 1, 1], [], []>} : vector<8x32xf32>, vector<32x256xf32>, vector<8x256xf32> -> vector<8x256xf32>
    %10 = vector.broadcast %2 : vector<8x1xf32> to vector<8x256xf32>
    %11 = arith.addf %9, %10 : vector<8x256xf32>
    %cst_15 = arith.constant dense<0.000000e+00> : vector<8x8xf32>
    %12 = tpu.matmul %11, %11, %cst_15 {dimension_numbers = #tpu.dot_dimension_numbers<[1], [1], [0], [0], [0, 0, 1, 0], [], []>} : vector<8x256xf32>, vector<8x256xf32>, vector<8x8xf32> -> vector<8x8xf32>
    %13 = vector.extract_strided_slice %12 {offsets = [4, 0], sizes = [4, 4], strides = [1, 1]} : vector<8x8xf32> to vector<4x4xf32>
    %cst_16 = arith.constant dense<0xFF800000> : vector<4xf32>
    %14 = vector.multi_reduction <maximumf>, %13, %cst_16 [1] : vector<4x4xf32> to vector<4xf32>
    %15 = vector.shape_cast %14 : vector<4xf32> to vector<4x1xf32>
    %16 = vector.broadcast %15 : vector<4x1xf32> to vector<4x4xf32>
    %17 = arith.subf %13, %16 : vector<4x4xf32>
    %18 = math.exp %17 : vector<4x4xf32>
    %cst_17 = arith.constant dense<0.000000e+00> : vector<4xf32>
    %19 = vector.multi_reduction <add>, %18, %cst_17 [1] : vector<4x4xf32> to vector<4xf32>
    %20 = vector.shape_cast %19 : vector<4xf32> to vector<4x1xf32>
    %21 = vector.broadcast %20 : vector<4x1xf32> to vector<4x4xf32>
    %22 = arith.divf %18, %21 : vector<4x4xf32>
    %cst_18 = arith.constant dense<0.000000e+00> : vector<4x32xf32>
    %23 = tpu.matmul %22, %3, %cst_18 {dimension_numbers = #tpu.dot_dimension_numbers<[0], [0], [1], [1], [0, 1, 1, 1], [], []>} : vector<4x4xf32>, vector<4x32xf32>, vector<4x32xf32> -> vector<4x32xf32>
    %cst_19 = arith.constant dense<0.000000e+00> : vector<32x32xf32>
    %24 = tpu.matmul %5, %23, %cst_19 {dimension_numbers = #tpu.dot_dimension_numbers<[1], [0], [0], [1], [0, 0, 1, 1], [], []>} : vector<32x4xf32>, vector<4x32xf32>, vector<32x32xf32> -> vector<32x32xf32>
    %cst_20 = arith.constant dense<0.000000e+00> : vector<4x1xf32>
    %25 = tpu.matmul %22, %4, %cst_20 {dimension_numbers = #tpu.dot_dimension_numbers<[0], [0], [1], [1], [0, 1, 1, 1], [], []>} : vector<4x4xf32>, vector<4x1xf32>, vector<4x1xf32> -> vector<4x1xf32>
    %cst_21 = arith.constant dense<0.000000e+00> : vector<32x1xf32>
    %26 = tpu.matmul %5, %25, %cst_21 {dimension_numbers = #tpu.dot_dimension_numbers<[1], [0], [0], [1], [0, 0, 1, 1], [], []>} : vector<32x4xf32>, vector<4x1xf32>, vector<32x1xf32> -> vector<32x1xf32>
    %27 = arith.addf %26, %6 : vector<32x1xf32>
    %cst_22 = arith.constant dense<0.000000e+00> : vector<32x256xf32>
    %28 = tpu.matmul %24, %8, %cst_22 {dimension_numbers = #tpu.dot_dimension_numbers<[1], [0], [0], [1], [0, 0, 1, 1], [], []>} : vector<32x32xf32>, vector<32x256xf32>, vector<32x256xf32> -> vector<32x256xf32>
    %29 = vector.broadcast %27 : vector<32x1xf32> to vector<32x256xf32>
    %30 = arith.addf %28, %29 : vector<32x256xf32>
    %31 = vector.broadcast %0 : f32 to vector<32x256xf32>
    %32 = arith.mulf %31, %30 : vector<32x256xf32>
    %33 = arith.addf %32, %8 : vector<32x256xf32>
    %c0_23 = arith.constant 0 : index
    %c0_24 = arith.constant 0 : index
    %c0_25 = arith.constant 0 : index
    %34 = vector.load %arg9[%c0_23, %c0_24, %c0_25] : memref<2x32x256xf32, #tpu.memory_space<vmem>>, vector<1x32x256xf32>
    %35 = vector.shape_cast %34 : vector<1x32x256xf32> to vector<32x256xf32>
    %36 = vector.shape_cast %33 : vector<32x256xf32> to vector<1x32x256xf32>
    tpu.vector_store %arg9[%c0_23, %c0_24, %c0_25], %36 {strides = array<i32>} : memref<2x32x256xf32, #tpu.memory_space<vmem>>, vector<1x32x256xf32>,
    %c1 = arith.constant 1 : index
    %c0_26 = arith.constant 0 : index
    %c0_27 = arith.constant 0 : index
    %37 = vector.load %arg1[%c1, %c0_26, %c0_27] : memref<2x32x256xf32, #tpu.memory_space<vmem>>, vector<1x32x256xf32>
    %38 = vector.shape_cast %37 : vector<1x32x256xf32> to vector<32x256xf32>
    %cst_28 = arith.constant dense<0.000000e+00> : vector<8x256xf32>
    %39 = tpu.matmul %1, %38, %cst_28 {dimension_numbers = #tpu.dot_dimension_numbers<[1], [0], [0], [1], [0, 0, 1, 1], [], []>} : vector<8x32xf32>, vector<32x256xf32>, vector<8x256xf32> -> vector<8x256xf32>
    %40 = vector.broadcast %2 : vector<8x1xf32> to vector<8x256xf32>
    %41 = arith.addf %39, %40 : vector<8x256xf32>
    %cst_29 = arith.constant dense<0.000000e+00> : vector<8x8xf32>
    %42 = tpu.matmul %41, %41, %cst_29 {dimension_numbers = #tpu.dot_dimension_numbers<[1], [1], [0], [0], [0, 0, 1, 0], [], []>} : vector<8x256xf32>, vector<8x256xf32>, vector<8x8xf32> -> vector<8x8xf32>
    %43 = vector.extract_strided_slice %42 {offsets = [4, 0], sizes = [4, 4], strides = [1, 1]} : vector<8x8xf32> to vector<4x4xf32>
    %cst_30 = arith.constant dense<0xFF800000> : vector<4xf32>
    %44 = vector.multi_reduction <maximumf>, %43, %cst_30 [1] : vector<4x4xf32> to vector<4xf32>
    %45 = vector.shape_cast %44 : vector<4xf32> to vector<4x1xf32>
    %46 = vector.broadcast %45 : vector<4x1xf32> to vector<4x4xf32>
    %47 = arith.subf %43, %46 : vector<4x4xf32>
    %48 = math.exp %47 : vector<4x4xf32>
    %cst_31 = arith.constant dense<0.000000e+00> : vector<4xf32>
    %49 = vector.multi_reduction <add>, %48, %cst_31 [1] : vector<4x4xf32> to vector<4xf32>
    %50 = vector.shape_cast %49 : vector<4xf32> to vector<4x1xf32>
    %51 = vector.broadcast %50 : vector<4x1xf32> to vector<4x4xf32>
    %52 = arith.divf %48, %51 : vector<4x4xf32>
    %cst_32 = arith.constant dense<0.000000e+00> : vector<4x32xf32>
    %53 = tpu.matmul %52, %3, %cst_32 {dimension_numbers = #tpu.dot_dimension_numbers<[0], [0], [1], [1], [0, 1, 1, 1], [], []>} : vector<4x4xf32>, vector<4x32xf32>, vector<4x32xf32> -> vector<4x32xf32>
    %cst_33 = arith.constant dense<0.000000e+00> : vector<32x32xf32>
    %54 = tpu.matmul %5, %53, %cst_33 {dimension_numbers = #tpu.dot_dimension_numbers<[1], [0], [0], [1], [0, 0, 1, 1], [], []>} : vector<32x4xf32>, vector<4x32xf32>, vector<32x32xf32> -> vector<32x32xf32>
    %cst_34 = arith.constant dense<0.000000e+00> : vector<4x1xf32>
    %55 = tpu.matmul %52, %4, %cst_34 {dimension_numbers = #tpu.dot_dimension_numbers<[0], [0], [1], [1], [0, 1, 1, 1], [], []>} : vector<4x4xf32>, vector<4x1xf32>, vector<4x1xf32> -> vector<4x1xf32>
    %cst_35 = arith.constant dense<0.000000e+00> : vector<32x1xf32>
    %56 = tpu.matmul %5, %55, %cst_35 {dimension_numbers = #tpu.dot_dimension_numbers<[1], [0], [0], [1], [0, 0, 1, 1], [], []>} : vector<32x4xf32>, vector<4x1xf32>, vector<32x1xf32> -> vector<32x1xf32>
    %57 = arith.addf %56, %6 : vector<32x1xf32>
    %cst_36 = arith.constant dense<0.000000e+00> : vector<32x256xf32>
    %58 = tpu.matmul %54, %38, %cst_36 {dimension_numbers = #tpu.dot_dimension_numbers<[1], [0], [0], [1], [0, 0, 1, 1], [], []>} : vector<32x32xf32>, vector<32x256xf32>, vector<32x256xf32> -> vector<32x256xf32>
    %59 = vector.broadcast %57 : vector<32x1xf32> to vector<32x256xf32>
    %60 = arith.addf %58, %59 : vector<32x256xf32>
    %61 = vector.broadcast %0 : f32 to vector<32x256xf32>
    %62 = arith.mulf %61, %60 : vector<32x256xf32>
    %63 = arith.addf %62, %38 : vector<32x256xf32>
    %c1_37 = arith.constant 1 : index
    %c0_38 = arith.constant 0 : index
    %c0_39 = arith.constant 0 : index
    %64 = vector.load %arg9[%c1_37, %c0_38, %c0_39] : memref<2x32x256xf32, #tpu.memory_space<vmem>>, vector<1x32x256xf32>
    %65 = vector.shape_cast %64 : vector<1x32x256xf32> to vector<32x256xf32>
    %66 = vector.shape_cast %63 : vector<32x256xf32> to vector<1x32x256xf32>
    tpu.vector_store %arg9[%c1_37, %c0_38, %c0_39], %66 {strides = array<i32>} : memref<2x32x256xf32, #tpu.memory_space<vmem>>, vector<1x32x256xf32>,
    return
  }
  func.func @transform_0(%arg0: i32) -> (i32, i32, i32) {
    %c0_i32 = arith.constant 0 : i32
    %c0_i32_0 = arith.constant 0 : i32
    %c0_i32_1 = arith.constant 0 : i32
    return %arg0, %c0_i32, %c0_i32_0 : i32, i32, i32
  }
  func.func @transform_1(%arg0: i32) -> (i32, i32) {
    %c0_i32 = arith.constant 0 : i32
    %c0_i32_0 = arith.constant 0 : i32
    %c0_i32_1 = arith.constant 0 : i32
    return %c0_i32, %c0_i32_0 : i32, i32
  }
  func.func @transform_2(%arg0: i32) -> (i32, i32) {
    %c0_i32 = arith.constant 0 : i32
    %c0_i32_0 = arith.constant 0 : i32
    %c0_i32_1 = arith.constant 0 : i32
    return %c0_i32, %c0_i32_0 : i32, i32
  }
  func.func @transform_3(%arg0: i32) -> (i32, i32) {
    %c0_i32 = arith.constant 0 : i32
    %c0_i32_0 = arith.constant 0 : i32
    %c0_i32_1 = arith.constant 0 : i32
    return %c0_i32, %c0_i32_0 : i32, i32
  }
  func.func @transform_4(%arg0: i32) -> (i32, i32) {
    %c0_i32 = arith.constant 0 : i32
    %c0_i32_0 = arith.constant 0 : i32
    %c0_i32_1 = arith.constant 0 : i32
    return %c0_i32, %c0_i32_0 : i32, i32
  }
  func.func @transform_5(%arg0: i32) -> (i32, i32) {
    %c0_i32 = arith.constant 0 : i32
    %c0_i32_0 = arith.constant 0 : i32
    %c0_i32_1 = arith.constant 0 : i32
    return %c0_i32, %c0_i32_0 : i32, i32
  }
  func.func @transform_6(%arg0: i32) -> (i32, i32) {
    %c0_i32 = arith.constant 0 : i32
    %c0_i32_0 = arith.constant 0 : i32
    %c0_i32_1 = arith.constant 0 : i32
    return %c0_i32, %c0_i32_0 : i32, i32
  }
  func.func @transform_7(%arg0: i32) -> i32 {
    %c0_i32 = arith.constant 0 : i32
    %c0_i32_0 = arith.constant 0 : i32
    return %c0_i32 : i32
  }
  func.func @transform_8(%arg0: i32) -> (i32, i32, i32) {
    %c0_i32 = arith.constant 0 : i32
    %c0_i32_0 = arith.constant 0 : i32
    %c0_i32_1 = arith.constant 0 : i32
    return %arg0, %c0_i32, %c0_i32_0 : i32, i32, i32
  }
}

</mosaic_0001>

<llo_original>
// kernel: tpu_custom_call.1
$region0: #{tpu_custom_call.1}
  #allocation0 [shape = 'u32[]', space=smem, size = 0x4, offset = 0x4, fixed_abs, tag = 'smem constant byte address 0x4 - core index']
  #allocation1 [shape = 'u32[72,128]{1,0:T(1,128)}', space=vmem, size = 0x9000, scoped, tag = 'internal scratch']
  #allocation2 [shape = 'f32[1]{0:T(128)S(6)}', space=smem, size = 0x200, scoped, tag = 'scoped memory for tpu_custom_call.1']
  %s0 = inlined_call_operand.hbm [shape: f32[4,32,256], index: 0, kind: input, shape index: {}]
  %s1 = inlined_call_operand.vmem [shape: f32[8,32], index: 1, kind: input, shape index: {}]
  %s2 = inlined_call_operand.vmem [shape: f32[8,1], index: 2, kind: input, shape index: {}]
  %s3 = inlined_call_operand.vmem [shape: f32[4,32], index: 3, kind: input, shape index: {}]
  %s4 = inlined_call_operand.vmem [shape: f32[4,1], index: 4, kind: input, shape index: {}]
  %s5 = inlined_call_operand.vmem [shape: f32[32,4], index: 5, kind: input, shape index: {}]
  %s6 = inlined_call_operand.vmem [shape: f32[32,1], index: 6, kind: input, shape index: {}]
  %s7 = inlined_call_operand.<no memory space> [shape: f32[1], index: 7, kind: input, shape index: {}]
  %s8 = inlined_call_operand.hbm [shape: f32[4,32,256], index: 8, kind: output, shape index: {}]
  %s9 = sld [smem:[#allocation0]]
  $region69: #{tpu_custom_call.1} parent=0
    _
  %s11 = ssub.s32 1, %s9
  %s12 = scalar_select 0, %s11, %s9
  %13 = sst [smem:[#allocation2]] %s7
  $region1: #{tpu_custom_call.1} parent=0
    #allocation3 [shape = 'u8[131072]{0}', space=vmem, size = 0x20000, scoped, tag = 'input window, operand 0']
    #allocation4 [shape = 's32[2]{0}', space=sflag, size = 0x8, scoped, tag = 'scoped memory for tpu_custom_call.1']
    #allocation5 [shape = 's32[2]{0}', space=sflag, size = 0x8, scoped, tag = 'scoped memory for tpu_custom_call.1']
    #allocation6 [shape = 'u8[131072]{0}', space=vmem, size = 0x20000, scoped, tag = 'output window, operand 0']
    %14 = vsyncpa [#allocation4], 0
    %s15 = scalar_lea.sflag [#allocation4], 1
    %16 = vsyncpa %s15, 0
    %17 = vsyncpa [#allocation5], 0
    %s18 = scalar_lea.sflag [#allocation5], 1
    %19 = vsyncpa %s18, 0
    loop: start=0, step=1, limit=4
    $region2: #{tpu_custom_call.1} parent=1 // loop_pre_header
      _
    $region3: #{tpu_custom_call.1} parent=1 // loop_header
      %s21 = sphi 0, %s25
      %p22 = scmp.ge.s32.totalorder %s21, 4
      %s31 = sphi 0, %s33
      %s34 = sphi 0, %s31
      %s35 = sphi 0, %s34
      %s51 = sphi 0, %s35
      %s55 = sphi 0, %s55
      %s57 = sphi 0, %s55
      %s58 = sphi 0, %s57
      %s72 = sphi 0, %s58
      %s76 = sphi 0, %s76
      %s78 = sphi 0, %s76
      %s79 = sphi 0, %s78
      %s93 = sphi 0, %s79
      %s97 = sphi 0, %s97
      %s99 = sphi 0, %s97
      %s100 = sphi 0, %s99
      %s114 = sphi 0, %s100
      %s118 = sphi 0, %s118
      %s120 = sphi 0, %s118
      %s121 = sphi 0, %s120
      %s135 = sphi 0, %s121
      %s139 = sphi 0, %s139
      %s141 = sphi 0, %s139
      %s142 = sphi 0, %s141
      %s156 = sphi 0, %s142
      %s160 = sphi 0, %s160
      %s162 = sphi 0, %s160
      %s163 = sphi 0, %s162
      %s177 = sphi 0, %s163
      %s181 = sphi 0, %s181
      %s183 = sphi 0, %s181
      %s184 = sphi 0, %s183
      %s198 = sphi 0, %s184
      %s204 = sphi 0, %s206
      %s207 = sphi 0, %s204
      %s208 = sphi 0, %s207
      %s224 = sphi 0, %s208
    $region4: #{tpu_custom_call.1} parent=1 // loop_header_branch
      %24 = sbr.rel (%p22) target = $region8
    $region5: #{tpu_custom_call.1} parent=1 // loop_body
      %s26 = ssub.s32 %s21, 1
      %s27 = ssub.s32 %s21, 2
      %s28 = sadd.s32 %s21, 1
      %s29 = ssub.s32 %s21, %s28
      %p30 = scmp.eq.s32.totalorder %s29, 0
      %s32 = sadd.s32 %s31, 1
      %s33 = scalar_select %p30, %s31, %s32
      %p36 = pneg %p30
      %p37 = scmp.eq.s32.totalorder %s21, 1
      %p38 = por %p36, %p37
      %p39 = scmp.ne.s32.totalorder %s31, %s34
      %p40 = scmp.eq.s32.totalorder %s21, 0
      %p41 = por %p39, %p40
      %p42 = scmp.ne.s32.totalorder %s31, %s34
      %p43 = scmp.eq.s32.totalorder %s26, 1
      %p44 = por %p42, %p43
      %p45 = scmp.ne.s32.totalorder %s34, %s35
      %p46 = scmp.eq.s32.totalorder %s26, 0
      %p47 = por %p45, %p46
      %p48 = scmp.ne.s32.totalorder %s34, %s35
      %p49 = scmp.eq.s32.totalorder %s27, 1
      %p50 = por %p48, %p49
      %p52 = scmp.ne.s32.totalorder %s35, %s51
      %p53 = scmp.eq.s32.totalorder %s27, 0
      %p54 = por %p52, %p53
      %s56 = sadd.s32 %s55, 1
      %p59 = scmp.eq.s32.totalorder %s21, 1
      %p60 = scmp.ne.s32.totalorder %s55, %s57
      %p61 = scmp.eq.s32.totalorder %s21, 0
      %p62 = por %p60, %p61
      %p63 = scmp.ne.s32.totalorder %s55, %s57
      %p64 = scmp.eq.s32.totalorder %s26, 1
      %p65 = por %p63, %p64
      %p66 = scmp.ne.s32.totalorder %s57, %s58
      %p67 = scmp.eq.s32.totalorder %s26, 0
      %p68 = por %p66, %p67
      %p69 = scmp.ne.s32.totalorder %s57, %s58
      %p70 = scmp.eq.s32.totalorder %s27, 1
      %p71 = por %p69, %p70
      %p73 = scmp.ne.s32.totalorder %s58, %s72
      %p74 = scmp.eq.s32.totalorder %s27, 0
      %p75 = por %p73, %p74
      %s77 = sadd.s32 %s76, 1
      %p80 = scmp.eq.s32.totalorder %s21, 1
      %p81 = scmp.ne.s32.totalorder %s76, %s78
      %p82 = scmp.eq.s32.totalorder %s21, 0
      %p83 = por %p81, %p82
      %p84 = scmp.ne.s32.totalorder %s76, %s78
      %p85 = scmp.eq.s32.totalorder %s26, 1
      %p86 = por %p84, %p85
      %p87 = scmp.ne.s32.totalorder %s78, %s79
      %p88 = scmp.eq.s32.totalorder %s26, 0
      %p89 = por %p87, %p88
      %p90 = scmp.ne.s32.totalorder %s78, %s79
      %p91 = scmp.eq.s32.totalorder %s27, 1
      %p92 = por %p90, %p91
      %p94 = scmp.ne.s32.totalorder %s79, %s93
      %p95 = scmp.eq.s32.totalorder %s27, 0
      %p96 = por %p94, %p95
      %s98 = sadd.s32 %s97, 1
      %p101 = scmp.eq.s32.totalorder %s21, 1
      %p102 = scmp.ne.s32.totalorder %s97, %s99
      %p103 = scmp.eq.s32.totalorder %s21, 0
      %p104 = por %p102, %p103
      %p105 = scmp.ne.s32.totalorder %s97, %s99
      %p106 = scmp.eq.s32.totalorder %s26, 1
      %p107 = por %p105, %p106
      %p108 = scmp.ne.s32.totalorder %s99, %s100
      %p109 = scmp.eq.s32.totalorder %s26, 0
      %p110 = por %p108, %p109
      %p111 = scmp.ne.s32.totalorder %s99, %s100
      %p112 = scmp.eq.s32.totalorder %s27, 1
      %p113 = por %p111, %p112
      %p115 = scmp.ne.s32.totalorder %s100, %s114
      %p116 = scmp.eq.s32.totalorder %s27, 0
      %p117 = por %p115, %p116
      %s119 = sadd.s32 %s118, 1
      %p122 = scmp.eq.s32.totalorder %s21, 1
      %p123 = scmp.ne.s32.totalorder %s118, %s120
      %p124 = scmp.eq.s32.totalorder %s21, 0
      %p125 = por %p123, %p124
      %p126 = scmp.ne.s32.totalorder %s118, %s120
      %p127 = scmp.eq.s32.totalorder %s26, 1
      %p128 = por %p126, %p127
      %p129 = scmp.ne.s32.totalorder %s120, %s121
      %p130 = scmp.eq.s32.totalorder %s26, 0
      %p131 = por %p129, %p130
      %p132 = scmp.ne.s32.totalorder %s120, %s121
      %p133 = scmp.eq.s32.totalorder %s27, 1
      %p134 = por %p132, %p133
      %p136 = scmp.ne.s32.totalorder %s121, %s135
      %p137 = scmp.eq.s32.totalorder %s27, 0
      %p138 = por %p136, %p137
      %s140 = sadd.s32 %s139, 1
      %p143 = scmp.eq.s32.totalorder %s21, 1
      %p144 = scmp.ne.s32.totalorder %s139, %s141
      %p145 = scmp.eq.s32.totalorder %s21, 0
      %p146 = por %p144, %p145
      %p147 = scmp.ne.s32.totalorder %s139, %s141
      %p148 = scmp.eq.s32.totalorder %s26, 1
      %p149 = por %p147, %p148
      %p150 = scmp.ne.s32.totalorder %s141, %s142
      %p151 = scmp.eq.s32.totalorder %s26, 0
      %p152 = por %p150, %p151
      %p153 = scmp.ne.s32.totalorder %s141, %s142
      %p154 = scmp.eq.s32.totalorder %s27, 1
      %p155 = por %p153, %p154
      %p157 = scmp.ne.s32.totalorder %s142, %s156
      %p158 = scmp.eq.s32.totalorder %s27, 0
      %p159 = por %p157, %p158
      %s161 = sadd.s32 %s160, 1
      %p164 = scmp.eq.s32.totalorder %s21, 1
      %p165 = scmp.ne.s32.totalorder %s160, %s162
      %p166 = scmp.eq.s32.totalorder %s21, 0
      %p167 = por %p165, %p166
      %p168 = scmp.ne.s32.totalorder %s160, %s162
      %p169 = scmp.eq.s32.totalorder %s26, 1
      %p170 = por %p168, %p169
      %p171 = scmp.ne.s32.totalorder %s162, %s163
      %p172 = scmp.eq.s32.totalorder %s26, 0
      %p173 = por %p171, %p172
      %p174 = scmp.ne.s32.totalorder %s162, %s163
      %p175 = scmp.eq.s32.totalorder %s27, 1
      %p176 = por %p174, %p175
      %p178 = scmp.ne.s32.totalorder %s163, %s177
      %p179 = scmp.eq.s32.totalorder %s27, 0
      %p180 = por %p178, %p179
      %s182 = sadd.s32 %s181, 1
      %p185 = scmp.eq.s32.totalorder %s21, 1
      %p186 = scmp.ne.s32.totalorder %s181, %s183
      %p187 = scmp.eq.s32.totalorder %s21, 0
      %p188 = por %p186, %p187
      %p189 = scmp.ne.s32.totalorder %s181, %s183
      %p190 = scmp.eq.s32.totalorder %s26, 1
      %p191 = por %p189, %p190
      %p192 = scmp.ne.s32.totalorder %s183, %s184
      %p193 = scmp.eq.s32.totalorder %s26, 0
      %p194 = por %p192, %p193
      %p195 = scmp.ne.s32.totalorder %s183, %s184
      %p196 = scmp.eq.s32.totalorder %s27, 1
      %p197 = por %p195, %p196
      %p199 = scmp.ne.s32.totalorder %s184, %s198
      %p200 = scmp.eq.s32.totalorder %s27, 0
      %p201 = por %p199, %p200
      %s202 = ssub.s32 %s21, %s28
      %p203 = scmp.eq.s32.totalorder %s202, 0
      %s205 = sadd.s32 %s204, 1
      %s206 = scalar_select %p203, %s204, %s205
      %p209 = pneg %p203
      %p210 = scmp.eq.s32.totalorder %s21, 1
      %p211 = por %p209, %p210
      %p212 = scmp.ne.s32.totalorder %s204, %s207
      %p213 = scmp.eq.s32.totalorder %s21, 0
      %p214 = por %p212, %p213
      %p215 = scmp.ne.s32.totalorder %s204, %s207
      %p216 = scmp.eq.s32.totalorder %s26, 1
      %p217 = por %p215, %p216
      %p218 = scmp.ne.s32.totalorder %s207, %s208
      %p219 = scmp.eq.s32.totalorder %s26, 0
      %p220 = por %p218, %p219
      %p221 = scmp.ne.s32.totalorder %s207, %s208
      %p222 = scmp.eq.s32.totalorder %s27, 1
      %p223 = por %p221, %p222
      %p225 = scmp.ne.s32.totalorder %s208, %s224
      %p226 = scmp.eq.s32.totalorder %s27, 0
      %p227 = por %p225, %p226
      %p228 = scmp.le.s32.totalorder 1, %s21
      %p229 = scmp.lt.s32.totalorder %s21, 3
      %p230 = pnand %p228, %p229
      %p231 = pneg %p230
      // Predicated region
      $region9: #{tpu_custom_call.1} parent=5 // pred_check
        _
      $region10: #{tpu_custom_call.1} parent=5 // pred_check_branch
        %233 = sbr.rel (%p230) target = $region12
      $region11: #{tpu_custom_call.1} parent=5 // pred_region
        %s234 = ssub.s32 %s21, 1
        // Predicated region
        $region13: #{tpu_custom_call.1} parent=11 // pred_check
          %p235 = pneg %p68
        $region14: #{tpu_custom_call.1} parent=11 // pred_check_branch
          %237 = sbr.rel (%p235) target = $region16
        $region15: #{tpu_custom_call.1} parent=11 // pred_region
          _
        $region16: #{tpu_custom_call.1} parent=11 // pred_fallthru
          _
        // Predicated region
        $region17: #{tpu_custom_call.1} parent=11 // pred_check
          %p238 = pneg %p89
        $region18: #{tpu_custom_call.1} parent=11 // pred_check_branch
          %240 = sbr.rel (%p238) target = $region20
        $region19: #{tpu_custom_call.1} parent=11 // pred_region
          _
        $region20: #{tpu_custom_call.1} parent=11 // pred_fallthru
          _
        // Predicated region
        $region21: #{tpu_custom_call.1} parent=11 // pred_check
          %p241 = pneg %p110
        $region22: #{tpu_custom_call.1} parent=11 // pred_check_branch
          %243 = sbr.rel (%p241) target = $region24
        $region23: #{tpu_custom_call.1} parent=11 // pred_region
          _
        $region24: #{tpu_custom_call.1} parent=11 // pred_fallthru
          _
        // Predicated region
        $region25: #{tpu_custom_call.1} parent=11 // pred_check
          %p244 = pneg %p131
        $region26: #{tpu_custom_call.1} parent=11 // pred_check_branch
          %246 = sbr.rel (%p244) target = $region28
        $region27: #{tpu_custom_call.1} parent=11 // pred_region
          _
        $region28: #{tpu_custom_call.1} parent=11 // pred_fallthru
          _
        // Predicated region
        $region29: #{tpu_custom_call.1} parent=11 // pred_check
          %p247 = pneg %p152
        $region30: #{tpu_custom_call.1} parent=11 // pred_check_branch
          %249 = sbr.rel (%p247) target = $region32
        $region31: #{tpu_custom_call.1} parent=11 // pred_region
          _
        $region32: #{tpu_custom_call.1} parent=11 // pred_fallthru
          _
        // Predicated region
        $region33: #{tpu_custom_call.1} parent=11 // pred_check
          %p250 = pneg %p173
        $region34: #{tpu_custom_call.1} parent=11 // pred_check_branch
          %252 = sbr.rel (%p250) target = $region36
        $region35: #{tpu_custom_call.1} parent=11 // pred_region
          _
        $region36: #{tpu_custom_call.1} parent=11 // pred_fallthru
          _
        // Predicated region
        $region37: #{tpu_custom_call.1} parent=11 // pred_check
          %p253 = pneg %p194
        $region38: #{tpu_custom_call.1} parent=11 // pred_check_branch
          %255 = sbr.rel (%p253) target = $region40
        $region39: #{tpu_custom_call.1} parent=11 // pred_region
          _
        $region40: #{tpu_custom_call.1} parent=11 // pred_fallthru
          _
      $region12: #{tpu_custom_call.1} parent=5 // pred_fallthru
        _
      %p256 = scmp.lt.s32.totalorder %s21, 2
      // Predicated region
      $region41: #{tpu_custom_call.1} parent=5 // pred_check
        %p257 = pneg %p256
      $region42: #{tpu_custom_call.1} parent=5 // pred_check_branch
        %259 = sbr.rel (%p257) target = $region44
      $region43: #{tpu_custom_call.1} parent=5 // pred_region
        // Predicated region
        $region45: #{tpu_custom_call.1} parent=43 // pred_check
          %p260 = pneg %p41
        $region46: #{tpu_custom_call.1} parent=43 // pred_check_branch
          %262 = sbr.rel (%p260) target = $region48
        $region47: #{tpu_custom_call.1} parent=43 // pred_region
          %s263 = sand.u32 %s31, 1
          %s264 = scalar_lea.sflag [#allocation4], %s263
          %s265 = sand.u32 %s31, 1
          %s266 = smul.addr %s265, 128
          %s267 = scalar_lea.vmem [#allocation3], %s266
          %s268 = smul.u32 2, %s21
          %270 = vsyncadd %s264, 0
          %s271 = smul.addr %s268, 8
          %s272 = smul.addr %s271, 8
          %s273 = scalar_lea.hbm %s0, %s272
          %s274 = sshll.u32 %s273, 4
          %s275 = int_to_ptr.hbm [resolvable:$true] %s274
          %s276 = sshll.u32 %s267, 4
          %s277 = int_to_ptr.vmem [resolvable:$true] %s276
          %282 = dma.hbm_to_vmem [thread:$0]  %s275, 2048, %s277, %s264, 256, 256, 16
        $region48: #{tpu_custom_call.1} parent=43 // pred_fallthru
          _
      $region44: #{tpu_custom_call.1} parent=5 // pred_fallthru
        _
      %p283 = scmp.le.s32.totalorder 1, %s21
      %p284 = scmp.lt.s32.totalorder %s21, 3
      %p285 = pnand %p283, %p284
      %p286 = pneg %p285
      // Predicated region
      $region49: #{tpu_custom_call.1} parent=5 // pred_check
        _
      $region50: #{tpu_custom_call.1} parent=5 // pred_check_branch
        %288 = sbr.rel (%p285) target = $region52
      $region51: #{tpu_custom_call.1} parent=5 // pred_region
        %s289 = ssub.s32 %s21, 1
        %s290 = sand.u32 %s34, 1
        %s291 = scalar_lea.sflag [#allocation4], %s290
        %s292 = sand.u32 %s34, 1
        %s293 = smul.addr %s292, 128
        %s294 = scalar_lea.vmem [#allocation3], %s293
        // Predicated region
        $region53: #{tpu_custom_call.1} parent=51 // pred_check
          %p295 = pneg %p47
        $region54: #{tpu_custom_call.1} parent=51 // pred_check_branch
          %297 = sbr.rel (%p295) target = $region56
        $region55: #{tpu_custom_call.1} parent=51 // pred_region
          %299 = dma.done %s291, 2048
        $region56: #{tpu_custom_call.1} parent=51 // pred_fallthru
          _
        %s300 = sand.u32 %s34, 1
        %s301 = scalar_lea.sflag [#allocation4], %s300
        %s302 = sand.u32 %s34, 1
        %s303 = smul.addr %s302, 128
        %s304 = scalar_lea.vmem [#allocation3], %s303
        %p305 = pneg %p47
        %p306 = pneg %p44
        %p307 = pneg %p68
        %p308 = pneg %p65
        %p309 = pneg %p89
        %p310 = pneg %p86
        %p311 = pneg %p110
        %p312 = pneg %p107
        %p313 = pneg %p131
        %p314 = pneg %p128
        %p315 = pneg %p152
        %p316 = pneg %p149
        %p317 = pneg %p173
        %p318 = pneg %p170
        %p319 = pneg %p194
        %p320 = pneg %p191
        %p321 = pneg %p220
        %p322 = pneg %p217
        %s323 = sand.u32 %s207, 1
        %s324 = scalar_lea.sflag [#allocation5], %s323
        %s325 = sand.u32 %s207, 1
        %s326 = smul.addr %s325, 128
        %s327 = scalar_lea.vmem [#allocation6], %s326
        %s328 = smul.u32 2, %s26
        %s329 = smul.u32 2, %s26
        %s330 = sld [smem:[#allocation2]]
        %v331 = vld [vmem:[%s1] sm:$0xff]
        %v332 = vld [vmem:[%s2] sm:$0xff]
        %v333 = vld [vmem:[%s3] sm:$0xf]
        %v334 = vld [vmem:[%s4] sm:$0xf]
        %v335 = vld [vmem:[%s5] sm:$0xff]
        %v336 = vld [vmem:[%s5 + $0x8] sm:$0xff]
        %v337 = vld [vmem:[%s5 + $0x10] sm:$0xff]
        %v338 = vld [vmem:[%s5 + $0x18] sm:$0xff]
        %v339 = vld [vmem:[%s6] sm:$0xff]
        %v340 = vld [vmem:[%s6 + $0x8] sm:$0xff]
        %v341 = vld [vmem:[%s6 + $0x10] sm:$0xff]
        %v342 = vld [vmem:[%s6 + $0x18] sm:$0xff]
        %v343 = vld [vmem:[%s294] sm:$0xff]
        %v344 = vld [vmem:[%s294 + $0x8] sm:$0xff]
        %v345 = vld [vmem:[%s294 + $0x10] sm:$0xff]
        %v346 = vld [vmem:[%s294 + $0x18] sm:$0xff]
        %v347 = vld [vmem:[%s294 + $0x20] sm:$0xff]
        %v348 = vld [vmem:[%s294 + $0x28] sm:$0xff]
        %v349 = vld [vmem:[%s294 + $0x30] sm:$0xff]
        %v350 = vld [vmem:[%s294 + $0x38] sm:$0xff]
        %352 = vset.pattern.permute.xlu0 0
        %353 = vperm.xlu0 %352, %v332
        %v354 = vpop.permute.xlu0 %353
        %vm356 = vcmask 261120
        %v358 = vsel %vm356, %v331, 0
        %360 = vmatpush.msra.mxu0 0.0
        %361 = vmatpush.msra.mxu0 0.0
        %362 = vmatpush.msra.mxu0 0.0
        %363 = vmatpush.msra.mxu0 0.0
        %364 = vmatpush.msra.mxu0 0.0
        %365 = vmatpush.msra.mxu0 0.0
        %366 = vmatpush.msra.mxu0 0.0
        %367 = vmatpush.msra.mxu0 0.0
        %368 = vmatpush.msra.mxu0 0.0
        %369 = vmatpush.msra.mxu0 0.0
        %370 = vmatpush.msra.mxu0 0.0
        %371 = vmatpush.msra.mxu0 0.0
        %372 = vmatpush.msra.mxu0 %v349
        %373 = vmatpush.msra.mxu0 %v347
        %374 = vmatpush.msra.mxu0 %v345
        %375 = vmatpush.msra.mxu0 %v343
        %376 = vmatmul.f32.gmra.mxu0 %v358
        %v377 = vpop.f32.mrf.mxu0
        %v378 = vadd.f32 %v354, %v377
        %379 = vdwg.mxu0
        %380 = vmatpush.msra.mxu0 0.0
        %381 = vmatpush.msra.mxu0 0.0
        %382 = vmatpush.msra.mxu0 0.0
        %383 = vmatpush.msra.mxu0 0.0
        %384 = vmatpush.msra.mxu0 0.0
        %385 = vmatpush.msra.mxu0 0.0
        %386 = vmatpush.msra.mxu0 0.0
        %387 = vmatpush.msra.mxu0 0.0
        %388 = vmatpush.msra.mxu0 0.0
        %389 = vmatpush.msra.mxu0 0.0
        %390 = vmatpush.msra.mxu0 0.0
        %391 = vmatpush.msra.mxu0 0.0
        %392 = vmatpush.msra.mxu0 %v350
        %393 = vmatpush.msra.mxu0 %v348
        %394 = vmatpush.msra.mxu0 %v346
        %395 = vmatpush.msra.mxu0 %v344
        %396 = vmatmul.f32.gmra.mxu0 %v358
        %v397 = vpop.f32.mrf.mxu0
        %v398 = vadd.f32 %v354, %v397
        %399 = vdwg.mxu0
        %400 = vmatpush.xpose.msra.mxu0 0.0
        %401 = vmatpush.xpose.msra.mxu0 0.0
        %402 = vmatpush.xpose.msra.mxu0 0.0
        %403 = vmatpush.xpose.msra.mxu0 0.0
        %404 = vmatpush.xpose.msra.mxu0 0.0
        %405 = vmatpush.xpose.msra.mxu0 0.0
        %406 = vmatpush.xpose.msra.mxu0 0.0
        %407 = vmatpush.xpose.msra.mxu0 0.0
        %408 = vmatpush.xpose.msra.mxu0 0.0
        %409 = vmatpush.xpose.msra.mxu0 0.0
        %410 = vmatpush.xpose.msra.mxu0 0.0
        %411 = vmatpush.xpose.msra.mxu0 0.0
        %412 = vmatpush.xpose.msra.mxu0 0.0
        %413 = vmatpush.xpose.msra.mxu0 0.0
        %414 = vmatpush.xpose.msra.mxu0 0.0
        %415 = vmatpush.xpose.msra.mxu0 %v378
        %416 = vmatmul.f32.gmra.mxu0 %v378
        %v417 = vpop.f32.mrf.mxu0
        %v418 = vadd.f32 0.0, %v417
        %419 = vdwg.mxu0
        %420 = vmatpush.xpose.msra.mxu0 0.0
        %421 = vmatpush.xpose.msra.mxu0 0.0
        %422 = vmatpush.xpose.msra.mxu0 0.0
        %423 = vmatpush.xpose.msra.mxu0 0.0
        %424 = vmatpush.xpose.msra.mxu0 0.0
        %425 = vmatpush.xpose.msra.mxu0 0.0
        %426 = vmatpush.xpose.msra.mxu0 0.0
        %427 = vmatpush.xpose.msra.mxu0 0.0
        %428 = vmatpush.xpose.msra.mxu0 0.0
        %429 = vmatpush.xpose.msra.mxu0 0.0
        %430 = vmatpush.xpose.msra.mxu0 0.0
        %431 = vmatpush.xpose.msra.mxu0 0.0
        %432 = vmatpush.xpose.msra.mxu0 0.0
        %433 = vmatpush.xpose.msra.mxu0 0.0
        %434 = vmatpush.xpose.msra.mxu0 0.0
        %435 = vmatpush.xpose.msra.mxu0 %v398
        %436 = vmatmul.f32.gmra.mxu0 %v398
        %v437 = vpop.f32.mrf.mxu0
        %v438 = vadd.f32 %v418, %v437
        %439 = vdwg.mxu0
        %vm440 = vcmask 31748
        %v441 = vsel %vm440, %v438, -inf
        %442 = vmax.xlane.f32.xlu0 %v441
        %v443 = vpop.xlane.xlu0 %442
        %v444 = vsub.f32 %v438, %v443
        %v445 = vmul.f32 %v444, 1.442695
        %v446 = vpow.pop %v445
        %v447 = vsel %vm440, %v446, 0.0
        %448 = vadd.xlane.f32.xlu0 %v447
        %v449 = vpop.xlane.xlu0 %448
        %v450 = vrcp.pop %v449
        %v451 = vmul.f32 %v449, %v450
        %v452 = vsub.f32 1.0, %v451
        %v453 = vmul.f32 %v450, %v452
        %v454 = vadd.f32 %v450, %v453
        %vm455 = vweird.f32 %v449
        %vm456 = vweird.f32 %v450
        %vm457 = vmor %vm455, %vm456
        %v458 = vsel %vm457, %v450, %v454
        %v459 = vand.u32 2147483647, %v449
        %vm460 = vcmp.eq.f32.partialorder %v459, 8.507059e+37
        %v461 = vand.u32 %v449, 2147483648
        %v462 = vor.u32 1.1754944e-38, %v461
        %v463 = vsel %vm460, %v462, %v458
        %v464 = vmul.f32 %v446, %v463
        %v466 = vrot.slane %v464, 4
        %468 = vxpose.xlu0.b32.start [1/16] %v466, 128
        %469 = vxpose.xlu0.b32.cont [2/16] 0.0, 128
        %470 = vxpose.xlu0.b32.cont [3/16] 0.0, 128
        %471 = vxpose.xlu0.b32.cont [4/16] 0.0, 128
        %472 = vxpose.xlu0.b32.cont [5/16] 0.0, 128
        %473 = vxpose.xlu0.b32.cont [6/16] 0.0, 128
        %474 = vxpose.xlu0.b32.cont [7/16] 0.0, 128
        %475 = vxpose.xlu0.b32.cont [8/16] 0.0, 128
        %476 = vxpose.xlu0.b32.cont [9/16] 0.0, 128
        %477 = vxpose.xlu0.b32.cont [10/16] 0.0, 128
        %478 = vxpose.xlu0.b32.cont [11/16] 0.0, 128
        %479 = vxpose.xlu0.b32.cont [12/16] 0.0, 128
        %480 = vxpose.xlu0.b32.cont [13/16] 0.0, 128
        %481 = vxpose.xlu0.b32.cont [14/16] 0.0, 128
        %482 = vxpose.xlu0.b32.cont [15/16] 0.0, 128
        %483 = vxpose.xlu0.b32.end [16/16] 0.0, 128
        %v484 = vpop.trf.xlu0
        %v485 = vpop.trf.xlu0
        %v486 = vpop.trf.xlu0
        %v487 = vpop.trf.xlu0
        %v488 = vpop.trf.xlu0
        %v489 = vpop.trf.xlu0
        %v490 = vpop.trf.xlu0
        %v491 = vpop.trf.xlu0
        %v492 = vpop.trf.xlu0
        %v493 = vpop.trf.xlu0
        %v494 = vpop.trf.xlu0
        %v495 = vpop.trf.xlu0
        %v496 = vpop.trf.xlu0
        %v497 = vpop.trf.xlu0
        %v498 = vpop.trf.xlu0
        %v499 = vpop.trf.xlu0
        %vm500 = vcmask 31744
        %v502 = vsel %vm500, %v484, 0
        %vm504 = vcmask 1043456
        %v506 = vsel %vm504, %v333, 0
        %508 = vmatpush.msra.mxu0 0.0
        %509 = vmatpush.msra.mxu0 0.0
        %510 = vmatpush.msra.mxu0 0.0
        %511 = vmatpush.msra.mxu0 0.0
        %512 = vmatpush.msra.mxu0 0.0
        %513 = vmatpush.msra.mxu0 0.0
        %514 = vmatpush.msra.mxu0 0.0
        %515 = vmatpush.msra.mxu0 0.0
        %516 = vmatpush.msra.mxu0 0.0
        %517 = vmatpush.msra.mxu0 0.0
        %518 = vmatpush.msra.mxu0 0.0
        %519 = vmatpush.msra.mxu0 0.0
        %520 = vmatpush.msra.mxu0 0.0
        %521 = vmatpush.msra.mxu0 0.0
        %522 = vmatpush.msra.mxu0 0.0
        %523 = vmatpush.msra.mxu0 %v506
        %524 = vmatmul.f32.gmra.mxu0 %v502
        %v525 = vpop.f32.mrf.mxu0
        %v526 = vadd.f32 0.0, %v525
        %527 = vdwg.mxu0
        %v529 = vsel %vm500, %v335, 0
        %v532 = vsel %vm500, %v336, 0
        %v535 = vsel %vm500, %v337, 0
        %v538 = vsel %vm500, %v338, 0
        %v541 = vsel %vm504, %v526, 0
        %543 = vmatpush.msra.mxu0 0.0
        %544 = vmatpush.msra.mxu0 0.0
        %545 = vmatpush.msra.mxu0 0.0
        %546 = vmatpush.msra.mxu0 0.0
        %547 = vmatpush.msra.mxu0 0.0
        %548 = vmatpush.msra.mxu0 0.0
        %549 = vmatpush.msra.mxu0 0.0
        %550 = vmatpush.msra.mxu0 0.0
        %551 = vmatpush.msra.mxu0 0.0
        %552 = vmatpush.msra.mxu0 0.0
        %553 = vmatpush.msra.mxu0 0.0
        %554 = vmatpush.msra.mxu0 0.0
        %555 = vmatpush.msra.mxu0 0.0
        %556 = vmatpush.msra.mxu0 0.0
        %557 = vmatpush.msra.mxu0 0.0
        %558 = vmatpush.msra.mxu0 %v541
        %559 = vmatmul.f32.gmra.mxu0 %v529
        %v560 = vpop.f32.mrf.mxu0
        %v561 = vadd.f32 0.0, %v560
        %562 = vmatmul.f32.gmra.mxu0 %v532
        %v563 = vpop.f32.mrf.mxu0
        %v564 = vadd.f32 0.0, %v563
        %565 = vmatmul.f32.gmra.mxu0 %v535
        %v566 = vpop.f32.mrf.mxu0
        %v567 = vadd.f32 0.0, %v566
        %568 = vmatmul.f32.gmra.mxu0 %v538
        %v569 = vpop.f32.mrf.mxu0
        %v570 = vadd.f32 0.0, %v569
        %571 = vdwg.mxu0
        %v573 = vsel %vm504, %v334, 0
        %575 = vmatpush.msra.mxu0 0.0
        %576 = vmatpush.msra.mxu0 0.0
        %577 = vmatpush.msra.mxu0 0.0
        %578 = vmatpush.msra.mxu0 0.0
        %579 = vmatpush.msra.mxu0 0.0
        %580 = vmatpush.msra.mxu0 0.0
        %581 = vmatpush.msra.mxu0 0.0
        %582 = vmatpush.msra.mxu0 0.0
        %583 = vmatpush.msra.mxu0 0.0
        %584 = vmatpush.msra.mxu0 0.0
        %585 = vmatpush.msra.mxu0 0.0
        %586 = vmatpush.msra.mxu0 0.0
        %587 = vmatpush.msra.mxu0 0.0
        %588 = vmatpush.msra.mxu0 0.0
        %589 = vmatpush.msra.mxu0 0.0
        %590 = vmatpush.msra.mxu0 %v573
        %591 = vmatmul.f32.gmra.mxu0 %v502
        %v592 = vpop.f32.mrf.mxu0
        %v593 = vadd.f32 0.0, %v592
        %594 = vdwg.mxu0
        %v596 = vsel %vm504, %v593, 0
        %598 = vmatpush.msra.mxu0 0.0
        %599 = vmatpush.msra.mxu0 0.0
        %600 = vmatpush.msra.mxu0 0.0
        %601 = vmatpush.msra.mxu0 0.0
        %602 = vmatpush.msra.mxu0 0.0
        %603 = vmatpush.msra.mxu0 0.0
        %604 = vmatpush.msra.mxu0 0.0
        %605 = vmatpush.msra.mxu0 0.0
        %606 = vmatpush.msra.mxu0 0.0
        %607 = vmatpush.msra.mxu0 0.0
        %608 = vmatpush.msra.mxu0 0.0
        %609 = vmatpush.msra.mxu0 0.0
        %610 = vmatpush.msra.mxu0 0.0
        %611 = vmatpush.msra.mxu0 0.0
        %612 = vmatpush.msra.mxu0 0.0
        %613 = vmatpush.msra.mxu0 %v596
        %614 = vmatmul.f32.gmra.mxu0 %v529
        %v615 = vpop.f32.mrf.mxu0
        %v616 = vadd.f32 %v339, %v615
        %617 = vmatmul.f32.gmra.mxu0 %v532
        %v618 = vpop.f32.mrf.mxu0
        %v619 = vadd.f32 %v340, %v618
        %620 = vmatmul.f32.gmra.mxu0 %v535
        %v621 = vpop.f32.mrf.mxu0
        %v622 = vadd.f32 %v341, %v621
        %623 = vmatmul.f32.gmra.mxu0 %v538
        %v624 = vpop.f32.mrf.mxu0
        %v625 = vadd.f32 %v342, %v624
        %626 = vdwg.mxu0
        %628 = vset.pattern.permute.xlu0 0
        %629 = vperm.xlu0 %628, %v616
        %v630 = vpop.permute.xlu0 %629
        %633 = vset.pattern.permute.xlu0 0
        %634 = vperm.xlu0 %633, %v619
        %v635 = vpop.permute.xlu0 %634
        %638 = vset.pattern.permute.xlu0 0
        %639 = vperm.xlu0 %638, %v622
        %v640 = vpop.permute.xlu0 %639
        %643 = vset.pattern.permute.xlu0 0
        %644 = vperm.xlu0 %643, %v625
        %v645 = vpop.permute.xlu0 %644
        %v648 = vsel %vm356, %v561, 0
        %v651 = vsel %vm356, %v564, 0
        %v654 = vsel %vm356, %v567, 0
        %v657 = vsel %vm356, %v570, 0
        %659 = vmatpush.msra.mxu0 0.0
        %660 = vmatpush.msra.mxu0 0.0
        %661 = vmatpush.msra.mxu0 0.0
        %662 = vmatpush.msra.mxu0 0.0
        %663 = vmatpush.msra.mxu0 0.0
        %664 = vmatpush.msra.mxu0 0.0
        %665 = vmatpush.msra.mxu0 0.0
        %666 = vmatpush.msra.mxu0 0.0
        %667 = vmatpush.msra.mxu0 0.0
        %668 = vmatpush.msra.mxu0 0.0
        %669 = vmatpush.msra.mxu0 0.0
        %670 = vmatpush.msra.mxu0 0.0
        %671 = vmatpush.msra.mxu0 %v349
        %672 = vmatpush.msra.mxu0 %v347
        %673 = vmatpush.msra.mxu0 %v345
        %674 = vmatpush.msra.mxu0 %v343
        %675 = vmatmul.f32.gmra.mxu0 %v648
        %v676 = vpop.f32.mrf.mxu0
        %v677 = vadd.f32 %v630, %v676
        %678 = vmatmul.f32.gmra.mxu0 %v651
        %v679 = vpop.f32.mrf.mxu0
        %v680 = vadd.f32 %v635, %v679
        %681 = vmatmul.f32.gmra.mxu0 %v654
        %v682 = vpop.f32.mrf.mxu0
        %v683 = vadd.f32 %v640, %v682
        %684 = vmatmul.f32.gmra.mxu0 %v657
        %v685 = vpop.f32.mrf.mxu0
        %v686 = vadd.f32 %v645, %v685
        %687 = vdwg.mxu0
        %688 = vmatpush.msra.mxu0 0.0
        %689 = vmatpush.msra.mxu0 0.0
        %690 = vmatpush.msra.mxu0 0.0
        %691 = vmatpush.msra.mxu0 0.0
        %692 = vmatpush.msra.mxu0 0.0
        %693 = vmatpush.msra.mxu0 0.0
        %694 = vmatpush.msra.mxu0 0.0
        %695 = vmatpush.msra.mxu0 0.0
        %696 = vmatpush.msra.mxu0 0.0
        %697 = vmatpush.msra.mxu0 0.0
        %698 = vmatpush.msra.mxu0 0.0
        %699 = vmatpush.msra.mxu0 0.0
        %700 = vmatpush.msra.mxu0 %v350
        %701 = vmatpush.msra.mxu0 %v348
        %702 = vmatpush.msra.mxu0 %v346
        %703 = vmatpush.msra.mxu0 %v344
        %704 = vmatmul.f32.gmra.mxu0 %v648
        %v705 = vpop.f32.mrf.mxu0
        %v706 = vadd.f32 %v630, %v705
        %707 = vmatmul.f32.gmra.mxu0 %v651
        %v708 = vpop.f32.mrf.mxu0
        %v709 = vadd.f32 %v635, %v708
        %710 = vmatmul.f32.gmra.mxu0 %v654
        %v711 = vpop.f32.mrf.mxu0
        %v712 = vadd.f32 %v640, %v711
        %713 = vmatmul.f32.gmra.mxu0 %v657
        %v714 = vpop.f32.mrf.mxu0
        %v715 = vadd.f32 %v645, %v714
        %716 = vdwg.mxu0
        %v717 = vstv %s330
        %v718 = vmul.f32 %v717, %v677
        %v719 = vmul.f32 %v717, %v706
        %v720 = vmul.f32 %v717, %v680
        %v721 = vmul.f32 %v717, %v709
        %v722 = vmul.f32 %v717, %v683
        %v723 = vmul.f32 %v717, %v712
        %v724 = vmul.f32 %v717, %v686
        %v725 = vmul.f32 %v717, %v715
        %v726 = vadd.f32 %v718, %v343
        %v727 = vadd.f32 %v719, %v344
        %v728 = vadd.f32 %v720, %v345
        %v729 = vadd.f32 %v721, %v346
        %v730 = vadd.f32 %v722, %v347
        %v731 = vadd.f32 %v723, %v348
        %v732 = vadd.f32 %v724, %v349
        %v733 = vadd.f32 %v725, %v350
        %734 = vst [vmem:[%s327] sm:$0xff] %v726
        %735 = vst [vmem:[%s327 + $0x8] sm:$0xff] %v727
        %736 = vst [vmem:[%s327 + $0x10] sm:$0xff] %v728
        %737 = vst [vmem:[%s327 + $0x18] sm:$0xff] %v729
        %738 = vst [vmem:[%s327 + $0x20] sm:$0xff] %v730
        %739 = vst [vmem:[%s327 + $0x28] sm:$0xff] %v731
        %740 = vst [vmem:[%s327 + $0x30] sm:$0xff] %v732
        %741 = vst [vmem:[%s327 + $0x38] sm:$0xff] %v733
        %s742 = scalar_lea.vmem %s294, 64 [#allocation3]
        %v743 = vld [vmem:[%s742] sm:$0xff]
        %v744 = vld [vmem:[%s742 + $0x8] sm:$0xff]
        %v745 = vld [vmem:[%s742 + $0x10] sm:$0xff]
        %v746 = vld [vmem:[%s742 + $0x18] sm:$0xff]
        %v747 = vld [vmem:[%s742 + $0x20] sm:$0xff]
        %v748 = vld [vmem:[%s742 + $0x28] sm:$0xff]
        %v749 = vld [vmem:[%s742 + $0x30] sm:$0xff]
        %v750 = vld [vmem:[%s742 + $0x38] sm:$0xff]
        %751 = vmatpush.msra.mxu0 0.0
        %752 = vmatpush.msra.mxu0 0.0
        %753 = vmatpush.msra.mxu0 0.0
        %754 = vmatpush.msra.mxu0 0.0
        %755 = vmatpush.msra.mxu0 0.0
        %756 = vmatpush.msra.mxu0 0.0
        %757 = vmatpush.msra.mxu0 0.0
        %758 = vmatpush.msra.mxu0 0.0
        %759 = vmatpush.msra.mxu0 0.0
        %760 = vmatpush.msra.mxu0 0.0
        %761 = vmatpush.msra.mxu0 0.0
        %762 = vmatpush.msra.mxu0 0.0
        %763 = vmatpush.msra.mxu0 %v749
        %764 = vmatpush.msra.mxu0 %v747
        %765 = vmatpush.msra.mxu0 %v745
        %766 = vmatpush.msra.mxu0 %v743
        %767 = vmatmul.f32.gmra.mxu0 %v358
        %v768 = vpop.f32.mrf.mxu0
        %v769 = vadd.f32 %v354, %v768
        %770 = vdwg.mxu0
        %771 = vmatpush.msra.mxu0 0.0
        %772 = vmatpush.msra.mxu0 0.0
        %773 = vmatpush.msra.mxu0 0.0
        %774 = vmatpush.msra.mxu0 0.0
        %775 = vmatpush.msra.mxu0 0.0
        %776 = vmatpush.msra.mxu0 0.0
        %777 = vmatpush.msra.mxu0 0.0
        %778 = vmatpush.msra.mxu0 0.0
        %779 = vmatpush.msra.mxu0 0.0
        %780 = vmatpush.msra.mxu0 0.0
        %781 = vmatpush.msra.mxu0 0.0
        %782 = vmatpush.msra.mxu0 0.0
        %783 = vmatpush.msra.mxu0 %v750
        %784 = vmatpush.msra.mxu0 %v748
        %785 = vmatpush.msra.mxu0 %v746
        %786 = vmatpush.msra.mxu0 %v744
        %787 = vmatmul.f32.gmra.mxu0 %v358
        %v788 = vpop.f32.mrf.mxu0
        %v789 = vadd.f32 %v354, %v788
        %790 = vdwg.mxu0
        %791 = vmatpush.xpose.msra.mxu0 0.0
        %792 = vmatpush.xpose.msra.mxu0 0.0
        %793 = vmatpush.xpose.msra.mxu0 0.0
        %794 = vmatpush.xpose.msra.mxu0 0.0
        %795 = vmatpush.xpose.msra.mxu0 0.0
        %796 = vmatpush.xpose.msra.mxu0 0.0
        %797 = vmatpush.xpose.msra.mxu0 0.0
        %798 = vmatpush.xpose.msra.mxu0 0.0
        %799 = vmatpush.xpose.msra.mxu0 0.0
        %800 = vmatpush.xpose.msra.mxu0 0.0
        %801 = vmatpush.xpose.msra.mxu0 0.0
        %802 = vmatpush.xpose.msra.mxu0 0.0
        %803 = vmatpush.xpose.msra.mxu0 0.0
        %804 = vmatpush.xpose.msra.mxu0 0.0
        %805 = vmatpush.xpose.msra.mxu0 0.0
        %806 = vmatpush.xpose.msra.mxu0 %v769
        %807 = vmatmul.f32.gmra.mxu0 %v769
        %v808 = vpop.f32.mrf.mxu0
        %v809 = vadd.f32 0.0, %v808
        %810 = vdwg.mxu0
        %811 = vmatpush.xpose.msra.mxu0 0.0
        %812 = vmatpush.xpose.msra.mxu0 0.0
        %813 = vmatpush.xpose.msra.mxu0 0.0
        %814 = vmatpush.xpose.msra.mxu0 0.0
        %815 = vmatpush.xpose.msra.mxu0 0.0
        %816 = vmatpush.xpose.msra.mxu0 0.0
        %817 = vmatpush.xpose.msra.mxu0 0.0
        %818 = vmatpush.xpose.msra.mxu0 0.0
        %819 = vmatpush.xpose.msra.mxu0 0.0
        %820 = vmatpush.xpose.msra.mxu0 0.0
        %821 = vmatpush.xpose.msra.mxu0 0.0
        %822 = vmatpush.xpose.msra.mxu0 0.0
        %823 = vmatpush.xpose.msra.mxu0 0.0
        %824 = vmatpush.xpose.msra.mxu0 0.0
        %825 = vmatpush.xpose.msra.mxu0 0.0
        %826 = vmatpush.xpose.msra.mxu0 %v789
        %827 = vmatmul.f32.gmra.mxu0 %v789
        %v828 = vpop.f32.mrf.mxu0
        %v829 = vadd.f32 %v809, %v828
        %830 = vdwg.mxu0
        %v831 = vsel %vm440, %v829, -inf
        %832 = vmax.xlane.f32.xlu0 %v831
        %v833 = vpop.xlane.xlu0 %832
        %v834 = vsub.f32 %v829, %v833
        %v835 = vmul.f32 %v834, 1.442695
        %v836 = vpow.pop %v835
        %v837 = vsel %vm440, %v836, 0.0
        %838 = vadd.xlane.f32.xlu0 %v837
        %v839 = vpop.xlane.xlu0 %838
        %v840 = vrcp.pop %v839
        %v841 = vmul.f32 %v839, %v840
        %v842 = vsub.f32 1.0, %v841
        %v843 = vmul.f32 %v840, %v842
        %v844 = vadd.f32 %v840, %v843
        %vm845 = vweird.f32 %v839
        %vm846 = vweird.f32 %v840
        %vm847 = vmor %vm845, %vm846
        %v848 = vsel %vm847, %v840, %v844
        %v849 = vand.u32 2147483647, %v839
        %vm850 = vcmp.eq.f32.partialorder %v849, 8.507059e+37
        %v851 = vand.u32 %v839, 2147483648
        %v852 = vor.u32 1.1754944e-38, %v851
        %v853 = vsel %vm850, %v852, %v848
        %v854 = vmul.f32 %v836, %v853
        %v856 = vrot.slane %v854, 4
        %858 = vxpose.xlu0.b32.start [1/16] %v856, 128
        %859 = vxpose.xlu0.b32.cont [2/16] 0.0, 128
        %860 = vxpose.xlu0.b32.cont [3/16] 0.0, 128
        %861 = vxpose.xlu0.b32.cont [4/16] 0.0, 128
        %862 = vxpose.xlu0.b32.cont [5/16] 0.0, 128
        %863 = vxpose.xlu0.b32.cont [6/16] 0.0, 128
        %864 = vxpose.xlu0.b32.cont [7/16] 0.0, 128
        %865 = vxpose.xlu0.b32.cont [8/16] 0.0, 128
        %866 = vxpose.xlu0.b32.cont [9/16] 0.0, 128
        %867 = vxpose.xlu0.b32.cont [10/16] 0.0, 128
        %868 = vxpose.xlu0.b32.cont [11/16] 0.0, 128
        %869 = vxpose.xlu0.b32.cont [12/16] 0.0, 128
        %870 = vxpose.xlu0.b32.cont [13/16] 0.0, 128
        %871 = vxpose.xlu0.b32.cont [14/16] 0.0, 128
        %872 = vxpose.xlu0.b32.cont [15/16] 0.0, 128
        %873 = vxpose.xlu0.b32.end [16/16] 0.0, 128
        %v874 = vpop.trf.xlu0
        %v875 = vpop.trf.xlu0
        %v876 = vpop.trf.xlu0
        %v877 = vpop.trf.xlu0
        %v878 = vpop.trf.xlu0
        %v879 = vpop.trf.xlu0
        %v880 = vpop.trf.xlu0
        %v881 = vpop.trf.xlu0
        %v882 = vpop.trf.xlu0
        %v883 = vpop.trf.xlu0
        %v884 = vpop.trf.xlu0
        %v885 = vpop.trf.xlu0
        %v886 = vpop.trf.xlu0
        %v887 = vpop.trf.xlu0
        %v888 = vpop.trf.xlu0
        %v889 = vpop.trf.xlu0
        %v891 = vsel %vm500, %v874, 0
        %893 = vmatpush.msra.mxu0 0.0
        %894 = vmatpush.msra.mxu0 0.0
        %895 = vmatpush.msra.mxu0 0.0
        %896 = vmatpush.msra.mxu0 0.0
        %897 = vmatpush.msra.mxu0 0.0
        %898 = vmatpush.msra.mxu0 0.0
        %899 = vmatpush.msra.mxu0 0.0
        %900 = vmatpush.msra.mxu0 0.0
        %901 = vmatpush.msra.mxu0 0.0
        %902 = vmatpush.msra.mxu0 0.0
        %903 = vmatpush.msra.mxu0 0.0
        %904 = vmatpush.msra.mxu0 0.0
        %905 = vmatpush.msra.mxu0 0.0
        %906 = vmatpush.msra.mxu0 0.0
        %907 = vmatpush.msra.mxu0 0.0
        %908 = vmatpush.msra.mxu0 %v506
        %909 = vmatmul.f32.gmra.mxu0 %v891
        %v910 = vpop.f32.mrf.mxu0
        %v911 = vadd.f32 0.0, %v910
        %912 = vdwg.mxu0
        %v914 = vsel %vm504, %v911, 0
        %916 = vmatpush.msra.mxu0 0.0
        %917 = vmatpush.msra.mxu0 0.0
        %918 = vmatpush.msra.mxu0 0.0
        %919 = vmatpush.msra.mxu0 0.0
        %920 = vmatpush.msra.mxu0 0.0
        %921 = vmatpush.msra.mxu0 0.0
        %922 = vmatpush.msra.mxu0 0.0
        %923 = vmatpush.msra.mxu0 0.0
        %924 = vmatpush.msra.mxu0 0.0
        %925 = vmatpush.msra.mxu0 0.0
        %926 = vmatpush.msra.mxu0 0.0
        %927 = vmatpush.msra.mxu0 0.0
        %928 = vmatpush.msra.mxu0 0.0
        %929 = vmatpush.msra.mxu0 0.0
        %930 = vmatpush.msra.mxu0 0.0
        %931 = vmatpush.msra.mxu0 %v914
        %932 = vmatmul.f32.gmra.mxu0 %v529
        %v933 = vpop.f32.mrf.mxu0
        %v934 = vadd.f32 0.0, %v933
        %935 = vmatmul.f32.gmra.mxu0 %v532
        %v936 = vpop.f32.mrf.mxu0
        %v937 = vadd.f32 0.0, %v936
        %938 = vmatmul.f32.gmra.mxu0 %v535
        %v939 = vpop.f32.mrf.mxu0
        %v940 = vadd.f32 0.0, %v939
        %941 = vmatmul.f32.gmra.mxu0 %v538
        %v942 = vpop.f32.mrf.mxu0
        %v943 = vadd.f32 0.0, %v942
        %944 = vdwg.mxu0
        %945 = vmatpush.msra.mxu0 0.0
        %946 = vmatpush.msra.mxu0 0.0
        %947 = vmatpush.msra.mxu0 0.0
        %948 = vmatpush.msra.mxu0 0.0
        %949 = vmatpush.msra.mxu0 0.0
        %950 = vmatpush.msra.mxu0 0.0
        %951 = vmatpush.msra.mxu0 0.0
        %952 = vmatpush.msra.mxu0 0.0
        %953 = vmatpush.msra.mxu0 0.0
        %954 = vmatpush.msra.mxu0 0.0
        %955 = vmatpush.msra.mxu0 0.0
        %956 = vmatpush.msra.mxu0 0.0
        %957 = vmatpush.msra.mxu0 0.0
        %958 = vmatpush.msra.mxu0 0.0
        %959 = vmatpush.msra.mxu0 0.0
        %960 = vmatpush.msra.mxu0 %v573
        %961 = vmatmul.f32.gmra.mxu0 %v891
        %v962 = vpop.f32.mrf.mxu0
        %v963 = vadd.f32 0.0, %v962
        %964 = vdwg.mxu0
        %v966 = vsel %vm504, %v963, 0
        %968 = vmatpush.msra.mxu0 0.0
        %969 = vmatpush.msra.mxu0 0.0
        %970 = vmatpush.msra.mxu0 0.0
        %971 = vmatpush.msra.mxu0 0.0
        %972 = vmatpush.msra.mxu0 0.0
        %973 = vmatpush.msra.mxu0 0.0
        %974 = vmatpush.msra.mxu0 0.0
        %975 = vmatpush.msra.mxu0 0.0
        %976 = vmatpush.msra.mxu0 0.0
        %977 = vmatpush.msra.mxu0 0.0
        %978 = vmatpush.msra.mxu0 0.0
        %979 = vmatpush.msra.mxu0 0.0
        %980 = vmatpush.msra.mxu0 0.0
        %981 = vmatpush.msra.mxu0 0.0
        %982 = vmatpush.msra.mxu0 0.0
        %983 = vmatpush.msra.mxu0 %v966
        %984 = vmatmul.f32.gmra.mxu0 %v529
        %v985 = vpop.f32.mrf.mxu0
        %v986 = vadd.f32 %v339, %v985
        %987 = vmatmul.f32.gmra.mxu0 %v532
        %v988 = vpop.f32.mrf.mxu0
        %v989 = vadd.f32 %v340, %v988
        %990 = vmatmul.f32.gmra.mxu0 %v535
        %v991 = vpop.f32.mrf.mxu0
        %v992 = vadd.f32 %v341, %v991
        %993 = vmatmul.f32.gmra.mxu0 %v538
        %v994 = vpop.f32.mrf.mxu0
        %v995 = vadd.f32 %v342, %v994
        %996 = vdwg.mxu0
        %998 = vset.pattern.permute.xlu0 0
        %999 = vperm.xlu0 %998, %v986
        %v1000 = vpop.permute.xlu0 %999
        %1003 = vset.pattern.permute.xlu0 0
        %1004 = vperm.xlu0 %1003, %v989
        %v1005 = vpop.permute.xlu0 %1004
        %1008 = vset.pattern.permute.xlu0 0
        %1009 = vperm.xlu0 %1008, %v992
        %v1010 = vpop.permute.xlu0 %1009
        %1013 = vset.pattern.permute.xlu0 0
        %1014 = vperm.xlu0 %1013, %v995
        %v1015 = vpop.permute.xlu0 %1014
        %v1018 = vsel %vm356, %v934, 0
        %v1021 = vsel %vm356, %v937, 0
        %v1024 = vsel %vm356, %v940, 0
        %v1027 = vsel %vm356, %v943, 0
        %1029 = vmatpush.msra.mxu0 0.0
        %1030 = vmatpush.msra.mxu0 0.0
        %1031 = vmatpush.msra.mxu0 0.0
        %1032 = vmatpush.msra.mxu0 0.0
        %1033 = vmatpush.msra.mxu0 0.0
        %1034 = vmatpush.msra.mxu0 0.0
        %1035 = vmatpush.msra.mxu0 0.0
        %1036 = vmatpush.msra.mxu0 0.0
        %1037 = vmatpush.msra.mxu0 0.0
        %1038 = vmatpush.msra.mxu0 0.0
        %1039 = vmatpush.msra.mxu0 0.0
        %1040 = vmatpush.msra.mxu0 0.0
        %1041 = vmatpush.msra.mxu0 %v749
        %1042 = vmatpush.msra.mxu0 %v747
        %1043 = vmatpush.msra.mxu0 %v745
        %1044 = vmatpush.msra.mxu0 %v743
        %1045 = vmatmul.f32.gmra.mxu0 %v1018
        %v1046 = vpop.f32.mrf.mxu0
        %v1047 = vadd.f32 %v1000, %v1046
        %1048 = vmatmul.f32.gmra.mxu0 %v1021
        %v1049 = vpop.f32.mrf.mxu0
        %v1050 = vadd.f32 %v1005, %v1049
        %1051 = vmatmul.f32.gmra.mxu0 %v1024
        %v1052 = vpop.f32.mrf.mxu0
        %v1053 = vadd.f32 %v1010, %v1052
        %1054 = vmatmul.f32.gmra.mxu0 %v1027
        %v1055 = vpop.f32.mrf.mxu0
        %v1056 = vadd.f32 %v1015, %v1055
        %1057 = vdwg.mxu0
        %1058 = vmatpush.msra.mxu0 0.0
        %1059 = vmatpush.msra.mxu0 0.0
        %1060 = vmatpush.msra.mxu0 0.0
        %1061 = vmatpush.msra.mxu0 0.0
        %1062 = vmatpush.msra.mxu0 0.0
        %1063 = vmatpush.msra.mxu0 0.0
        %1064 = vmatpush.msra.mxu0 0.0
        %1065 = vmatpush.msra.mxu0 0.0
        %1066 = vmatpush.msra.mxu0 0.0
        %1067 = vmatpush.msra.mxu0 0.0
        %1068 = vmatpush.msra.mxu0 0.0
        %1069 = vmatpush.msra.mxu0 0.0
        %1070 = vmatpush.msra.mxu0 %v750
        %1071 = vmatpush.msra.mxu0 %v748
        %1072 = vmatpush.msra.mxu0 %v746
        %1073 = vmatpush.msra.mxu0 %v744
        %1074 = vmatmul.f32.gmra.mxu0 %v1018
        %v1075 = vpop.f32.mrf.mxu0
        %v1076 = vadd.f32 %v1000, %v1075
        %1077 = vmatmul.f32.gmra.mxu0 %v1021
        %v1078 = vpop.f32.mrf.mxu0
        %v1079 = vadd.f32 %v1005, %v1078
        %1080 = vmatmul.f32.gmra.mxu0 %v1024
        %v1081 = vpop.f32.mrf.mxu0
        %v1082 = vadd.f32 %v1010, %v1081
        %1083 = vmatmul.f32.gmra.mxu0 %v1027
        %v1084 = vpop.f32.mrf.mxu0
        %v1085 = vadd.f32 %v1015, %v1084
        %1086 = vdwg.mxu0
        %v1087 = vmul.f32 %v717, %v1047
        %v1088 = vmul.f32 %v717, %v1076
        %v1089 = vmul.f32 %v717, %v1050
        %v1090 = vmul.f32 %v717, %v1079
        %v1091 = vmul.f32 %v717, %v1053
        %v1092 = vmul.f32 %v717, %v1082
        %v1093 = vmul.f32 %v717, %v1056
        %v1094 = vmul.f32 %v717, %v1085
        %v1095 = vadd.f32 %v1087, %v743
        %v1096 = vadd.f32 %v1088, %v744
        %v1097 = vadd.f32 %v1089, %v745
        %v1098 = vadd.f32 %v1090, %v746
        %v1099 = vadd.f32 %v1091, %v747
        %v1100 = vadd.f32 %v1092, %v748
        %v1101 = vadd.f32 %v1093, %v749
        %v1102 = vadd.f32 %v1094, %v750
        %s1103 = scalar_lea.vmem %s327, 64 [#allocation6]
        %1104 = vst [vmem:[%s1103] sm:$0xff] %v1095
        %1105 = vst [vmem:[%s1103 + $0x8] sm:$0xff] %v1096
        %1106 = vst [vmem:[%s1103 + $0x10] sm:$0xff] %v1097
        %1107 = vst [vmem:[%s1103 + $0x18] sm:$0xff] %v1098
        %1108 = vst [vmem:[%s1103 + $0x20] sm:$0xff] %v1099
        %1109 = vst [vmem:[%s1103 + $0x28] sm:$0xff] %v1100
        %1110 = vst [vmem:[%s1103 + $0x30] sm:$0xff] %v1101
        %1111 = vst [vmem:[%s1103 + $0x38] sm:$0xff] %v1102
        %s1112 = sand.u32 %s207, 1
        %s1113 = scalar_lea.sflag [#allocation5], %s1112
        %s1114 = sand.u32 %s207, 1
        %s1115 = smul.addr %s1114, 128
        %s1116 = scalar_lea.vmem [#allocation6], %s1115
        // Predicated region
        $region57: #{tpu_custom_call.1} parent=51 // pred_check
          %p1117 = pneg %p217
        $region58: #{tpu_custom_call.1} parent=51 // pred_check_branch
          %1119 = sbr.rel (%p1117) target = $region60
        $region59: #{tpu_custom_call.1} parent=51 // pred_region
          %s1120 = smul.u32 2, %s26
          %1122 = vsyncadd %s1113, 0
          %s1123 = smul.addr %s1120, 8
          %s1124 = smul.addr %s1123, 8
          %s1125 = scalar_lea.hbm %s8, %s1124
          %s1126 = sshll.u32 %s1116, 4
          %s1127 = int_to_ptr.vmem [resolvable:$true] %s1126
          %s1128 = sshll.u32 %s1125, 4
          %s1129 = int_to_ptr.hbm [resolvable:$true] %s1128
          %1134 = dma.vmem_to_hbm [thread:$0]  %s1127, 2048, %s1129, %s1113, 256, 256, 16
        $region60: #{tpu_custom_call.1} parent=51 // pred_fallthru
          _
      $region52: #{tpu_custom_call.1} parent=5 // pred_fallthru
        _
      %p1135 = scmp.le.s32.totalorder 2, %s21
      // Predicated region
      $region61: #{tpu_custom_call.1} parent=5 // pred_check
        %p1136 = pneg %p1135
      $region62: #{tpu_custom_call.1} parent=5 // pred_check_branch
        %1138 = sbr.rel (%p1136) target = $region64
      $region63: #{tpu_custom_call.1} parent=5 // pred_region
        %s1139 = ssub.s32 %s21, 2
        // Predicated region
        $region65: #{tpu_custom_call.1} parent=63 // pred_check
          %p1140 = pneg %p223
        $region66: #{tpu_custom_call.1} parent=63 // pred_check_branch
          %1142 = sbr.rel (%p1140) target = $region68
        $region67: #{tpu_custom_call.1} parent=63 // pred_region
          %s1143 = sand.u32 %s208, 1
          %s1144 = scalar_lea.sflag [#allocation5], %s1143
          %s1145 = sand.u32 %s208, 1
          %s1146 = smul.addr %s1145, 128
          %s1147 = scalar_lea.vmem [#allocation6], %s1146
          %1149 = dma.done %s1144, 2048
        $region68: #{tpu_custom_call.1} parent=63 // pred_fallthru
          _
      $region64: #{tpu_custom_call.1} parent=5 // pred_fallthru
        _
    $region6: #{tpu_custom_call.1} parent=1 // loop_footer
      %s25 = sadd.s32 1, %s21
    $region7: #{tpu_custom_call.1} parent=1 // loop_footer_branch
      %20 = sbr.rel target = $region3
    $region8: #{tpu_custom_call.1} parent=1 // loop_exit
      _
    %1150 = vsyncpa [#allocation4], 1
    %s1151 = scalar_lea.sflag [#allocation4], 1
    %1152 = vsyncpa %s1151, 1
    %1153 = vsyncpa [#allocation5], 1
    %s1154 = scalar_lea.sflag [#allocation5], 1
    %1155 = vsyncpa %s1154, 1

</llo_original>
